<compile_context>
chip_gen: v5e
topology: v5e:2x2
jax: 0.10.0
libtpu: 0.0.40
codegen_flags: <defaults>
</compile_context>

<pallas_src>
import math

import jax
import jax.numpy as jnp
from jax.experimental import pallas as pl
from jax.experimental.pallas import tpu as pltpu


def _round_up(v, m):
    return -(-v // m) * m


def _make_cnn_kernel(kernel_sizes, b_tile, L, K, col_starts, blk_widths):
    w_tot = sum(blk_widths)

    def kernel(x_ref, w_ref, b_ref, wfc_ref, bfc_ref, out_ref):
        # Single fused MXU call covering every tap of every filter size (bf16 x bf16,
        # f32 accumulation).
        y = jnp.dot(x_ref[...], w_ref[...], preferred_element_type=jnp.float32)
        # (b_tile*L, Wtot) -> (b_tile, L, Wtot). Free when L % 8 == 0 (matches the sublane
        # tile, as in the demo); for general L one would keep y 2D and row-shift instead
        # (perf-only concern, not correctness).
        y3 = y.reshape(b_tile, L, w_tot)

        pooled = []
        for fs, c0, wb in zip(kernel_sizes, col_starts, blk_widths):
            T = L - fs + 1
            blk = y3[:, :, c0:c0 + wb]       # lane-aligned slice (c0, wb multiples of 128)
            acc = blk[:, 0:T, :]             # tap j = 0
            for j in range(1, fs):
                # Lane-rotate so tap j's K columns land on lanes [0, K) (XLU work),
                # then add at full lane width on the VPU.
                rolled = pltpu.roll(blk, shift=wb - j * K, axis=2)
                acc = acc + rolled[:, j:j + T, :]
            pooled.append(jnp.max(acc, axis=1))          # time max; lanes [0, K) valid
        feats = jnp.concatenate(pooled, axis=1)          # (b_tile, Wtot), lane-aligned

        # bias + ReLU once, after the max (valid: max_t relu(a_t + b) == relu(max_t a_t + b)).
        feats = jnp.maximum(feats + b_ref[...], 0.0)

        # TODO(synk): F.dropout is identity at inference; training-mode dropout would need
        # pltpu.prng_seed / prng_random_bits here.
        logits = jnp.dot(feats, wfc_ref[...], preferred_element_type=jnp.float32) + bfc_ref[...]
        out_ref[0] = logits.astype(out_ref.dtype)

    return kernel


def cnn_forward(x, conv_weights, conv_biases, fc_weight, fc_bias, kernel_sizes, *, b_tile=None):
    """Forward pass of CNN (post-embedding, as in the module's forward signature).

    x            : (B, L, D) float32 embedded tokens.
    conv_weights : list of (K, 1, fs*D) Conv1d weights (PyTorch layout), one per filter size.
    conv_biases  : list of (K,) Conv1d biases.
    fc_weight    : (C, n*K) Linear weight (PyTorch layout).
    fc_bias      : (C,) Linear bias.
    Returns logits (B, C) float32.
    """
    B, L, D = x.shape
    n = len(kernel_sizes)
    K = conv_biases[0].shape[0]
    C = fc_weight.shape[0]
    assert L >= max(kernel_sizes), "seq_len must be >= largest filter size"

    # --- lane-aligned packing: one 128-lane-aligned column block per filter size -------
    blk_w = [_round_up(fs * K, 128) for fs in kernel_sizes]
    col_starts = [sum(blk_w[:i]) for i in range(n)]
    w_tot = sum(blk_w)

    w_blocks, b_rows, wfc_rows = [], [], []
    for i, fs in enumerate(kernel_sizes):
        kw = conv_weights[i].reshape(K, fs, D)                       # kw[k, j, d]
        wb = jnp.transpose(kw, (2, 1, 0)).reshape(D, fs * K)         # col = j*K + k (tap-major)
        w_blocks.append(jnp.pad(wb, ((0, 0), (0, blk_w[i] - fs * K))))
        b_rows.append(jnp.pad(conv_biases[i], (0, blk_w[i] - K)))
        wfc_rows.append(jnp.pad(fc_weight[:, i * K:(i + 1) * K].T,
                                ((0, blk_w[i] - K), (0, 0))))
    W_all = jnp.concatenate(w_blocks, axis=1).astype(jnp.bfloat16)   # (D, Wtot)
    b_all = jnp.concatenate(b_rows).reshape(1, w_tot).astype(jnp.float32)
    wfc_t = jnp.concatenate(wfc_rows, axis=0).astype(jnp.float32)    # (Wtot, C), zero pad rows
    bfc = fc_bias.reshape(1, C).astype(jnp.float32)

    # --- batch-tile selection -----------------------------------------------------------
    if b_tile is None:
        # Dominant live slab is the f32 y = (b_tile*L, Wtot). Keep it ~<= 8 MiB, which is
        # conservative for v7x (64 MiB VMEM) and leaves ample headroom on v5e/v6e (128 MiB).
        y_budget = 8 << 20
        by_vmem = max(1, y_budget // (L * w_tot * 4))
        by_mxu = pl.cdiv(512, L)              # target >= 512 MXU rows per grid step
        b_tile = max(1, min(B, by_vmem, by_mxu))
    b_tile = max(1, min(int(b_tile), B))
    # Keep the x block's sublane count (b_tile * L) a multiple of 8.
    factor = 8 // math.gcd(L, 8)
    b_tile = _round_up(b_tile, factor)

    grid_b = pl.cdiv(B, b_tile)
    b_pad = grid_b * b_tile
    if b_pad != B:
        x = jnp.pad(x, ((0, b_pad - B), (0, 0), (0, 0)))     # zero batches, sliced off below
    x2d = x.reshape(b_pad * L, D).astype(jnp.bfloat16)       # reshape + bf16 cast in wrapper
    rows_tile = b_tile * L

    kernel = _make_cnn_kernel(tuple(kernel_sizes), b_tile, L, K,
                              tuple(col_starts), tuple(blk_w))

    flops = 2 * b_pad * L * D * w_tot + 2 * b_pad * w_tot * C
    bytes_accessed = (x2d.size * 2 + W_all.size * 2
                      + (b_all.size + wfc_t.size + bfc.size) * 4 + b_pad * C * 4)
    # Rough per-step VMEM: double-buffered bf16 x tile + resident params + y/acc temporaries.
    est_vmem = (2 * rows_tile * D * 2 + D * w_tot * 2 + w_tot * 4 + w_tot * C * 4
                + 4 * rows_tile * w_tot * 4 + b_tile * w_tot * 4)
    vmem_limit = int(min(max(2 * est_vmem, 16 << 20), 64 << 20))

    out = pl.pallas_call(
        kernel,
        out_shape=jax.ShapeDtypeStruct((grid_b, b_tile, C), jnp.float32),
        grid=(grid_b,),
        in_specs=[
            pl.BlockSpec((rows_tile, D), lambda i: (i, 0)),    # streamed x tile
            pl.BlockSpec((D, w_tot), lambda i: (0, 0)),        # resident packed conv weights
            pl.BlockSpec((1, w_tot), lambda i: (0, 0)),        # resident packed conv bias
            pl.BlockSpec((w_tot, C), lambda i: (0, 0)),        # resident fc weight^T (padded)
            pl.BlockSpec((1, C), lambda i: (0, 0)),            # resident fc bias
        ],
        out_specs=pl.BlockSpec((1, b_tile, C), lambda i: (i, 0, 0)),
        compiler_params=pltpu.CompilerParams(
            dimension_semantics=("parallel",),
            vmem_limit_bytes=vmem_limit,
        ),
        cost_estimate=pl.CostEstimate(flops=int(flops), transcendentals=0,
                                      bytes_accessed=int(bytes_accessed)),
    )(x2d, W_all, b_all, wfc_t, bfc)
    return out.reshape(b_pad, C)[:B]


if __name__ == "__main__":
    # Small shapes consistent with the module's forward.
    B, L, D = 4, 8, 32        # batch, seq_len, embed_dim
    K = 16                    # args.kernel_num
    C = 2                     # args.class_num
    kernel_sizes = (3, 4, 5)  # args.kernel_sizes

    key = jax.random.PRNGKey(0)
    keys = jax.random.split(key, 3 + 2 * len(kernel_sizes))

    # bf16-round the matmul operands so the kernel (bf16 MXU inputs, f32 accumulation) and
    # the f32 reference see identical values.
    x = jax.random.normal(keys[0], (B, L, D), jnp.float32)
    x = x.astype(jnp.bfloat16).astype(jnp.float32)

    conv_ws, conv_bs = [], []
    for i, fs in enumerate(kernel_sizes):
        kw = jax.random.normal(keys[1 + 2 * i], (K, 1, fs * D), jnp.float32) * 0.1
        kw = kw.astype(jnp.bfloat16).astype(jnp.float32)
        kb = jax.random.normal(keys[2 + 2 * i], (K,), jnp.float32) * 0.1
        conv_ws.append(kw)
        conv_bs.append(kb)
    Wfc = jax.random.normal(keys[1 + 2 * len(kernel_sizes)],
                            (C, len(kernel_sizes) * K), jnp.float32) * 0.1
    bfc_vec = jax.random.normal(keys[2 + 2 * len(kernel_sizes)], (C,), jnp.float32) * 0.1

    # b_tile=2 -> grid of 2 steps: exercises the pipelined, batch-tiled path.
    out = cnn_forward(x, conv_ws, conv_bs, Wfc, bfc_vec, kernel_sizes, b_tile=2)
    out = jax.block_until_ready(out)

    # Pure-JAX reference (mirrors the PyTorch forward exactly), full f32.
    feats_ref = []
    for fs, kw, kb in zip(kernel_sizes, conv_ws, conv_bs):
        T = L - fs + 1
        win = jnp.stack([x[:, t:t + fs, :].reshape(B, fs * D) for t in range(T)], axis=1)
        conv = jnp.einsum('btf,kf->btk', win, kw.reshape(K, fs * D),
                          precision=jax.lax.Precision.HIGHEST) + kb
        feats_ref.append(jnp.max(jax.nn.relu(conv), axis=1))
    ref = jnp.dot(jnp.concatenate(feats_ref, axis=1), Wfc.T,
                  precision=jax.lax.Precision.HIGHEST) + bfc_vec

    assert out.shape == (B, C)
    max_err = float(jnp.max(jnp.abs(out - ref)))
    assert jnp.allclose(out, ref, atol=2e-3, rtol=2e-3), (max_err, out, ref)
    print("KERNEL_OK")
</pallas_src>

<mosaic_0001>
module attributes {stable_mosaic.version = 11 : i64} {
  func.func @kernel(%arg0: i32, %arg1: memref<16x32xbf16, #tpu.memory_space<vmem>>, %arg2: memref<32x384xbf16, #tpu.memory_space<vmem>>, %arg3: memref<1x384xf32, #tpu.memory_space<vmem>>, %arg4: memref<384x2xf32, #tpu.memory_space<vmem>>, %arg5: memref<1x2xf32, #tpu.memory_space<vmem>>, %arg6: memref<1x2x2xf32, #tpu.memory_space<vmem>>) attributes {dimension_semantics = [#tpu.dimension_semantics<parallel>], iteration_bounds = array<i64: 2>, scalar_prefetch = 0 : i64, scratch_operands = 0 : i64, tpu.core_type = #tpu.core_type<tc>, window_params = [{transform_indices = @transform_0, window_bounds = array<i64: 16, 32>}, {pipeline_mode = #tpu.pipeline_mode<synchronous>, transform_indices = @transform_1, window_bounds = array<i64: 32, 384>}, {pipeline_mode = #tpu.pipeline_mode<synchronous>, transform_indices = @transform_2, window_bounds = array<i64: 1, 384>}, {pipeline_mode = #tpu.pipeline_mode<synchronous>, transform_indices = @transform_3, window_bounds = array<i64: 384, 2>}, {pipeline_mode = #tpu.pipeline_mode<synchronous>, transform_indices = @transform_4, window_bounds = array<i64: 1, 2>}, {transform_indices = @transform_5, window_bounds = array<i64: 1, 2, 2>}]} {
    %c0 = arith.constant 0 : index
    %c0_0 = arith.constant 0 : index
    %0 = vector.load %arg1[%c0, %c0_0] : memref<16x32xbf16, #tpu.memory_space<vmem>>, vector<16x32xbf16>
    %c0_1 = arith.constant 0 : index
    %c0_2 = arith.constant 0 : index
    %1 = vector.load %arg2[%c0_1, %c0_2] : memref<32x384xbf16, #tpu.memory_space<vmem>>, vector<32x384xbf16>
    %cst = arith.constant dense<0.000000e+00> : vector<16x384xf32>
    %2 = tpu.matmul %0, %1, %cst {dimension_numbers = #tpu.dot_dimension_numbers<[1], [0], [0], [1], [0, 0, 1, 1], [], []>} : vector<16x32xbf16>, vector<32x384xbf16>, vector<16x384xf32> -> vector<16x384xf32>
    %3 = vector.shape_cast %2 : vector<16x384xf32> to vector<2x8x384xf32>
    %4 = vector.extract_strided_slice %3 {offsets = [0, 0, 0], sizes = [2, 8, 128], strides = [1, 1, 1]} : vector<2x8x384xf32> to vector<2x8x128xf32>
    %5 = vector.extract_strided_slice %4 {offsets = [0, 0, 0], sizes = [2, 6, 128], strides = [1, 1, 1]} : vector<2x8x128xf32> to vector<2x6x128xf32>
    %c112_i32 = arith.constant 112 : i32
    %6 = tpu.dynamic_rotate %4 by %c112_i32 dim 2 : vector<2x8x128xf32>, i32 -> vector<2x8x128xf32>
    %7 = vector.extract_strided_slice %6 {offsets = [0, 1, 0], sizes = [2, 6, 128], strides = [1, 1, 1]} : vector<2x8x128xf32> to vector<2x6x128xf32>
    %8 = arith.addf %5, %7 : vector<2x6x128xf32>
    %c96_i32 = arith.constant 96 : i32
    %9 = tpu.dynamic_rotate %4 by %c96_i32 dim 2 : vector<2x8x128xf32>, i32 -> vector<2x8x128xf32>
    %10 = vector.extract_strided_slice %9 {offsets = [0, 2, 0], sizes = [2, 6, 128], strides = [1, 1, 1]} : vector<2x8x128xf32> to vector<2x6x128xf32>
    %11 = arith.addf %8, %10 : vector<2x6x128xf32>
    %cst_3 = arith.constant dense<0xFF800000> : vector<2x128xf32>
    %12 = vector.multi_reduction <maximumf>, %11, %cst_3 [1] : vector<2x6x128xf32> to vector<2x128xf32>
    %13 = vector.extract_strided_slice %3 {offsets = [0, 0, 128], sizes = [2, 8, 128], strides = [1, 1, 1]} : vector<2x8x384xf32> to vector<2x8x128xf32>
    %14 = vector.extract_strided_slice %13 {offsets = [0, 0, 0], sizes = [2, 5, 128], strides = [1, 1, 1]} : vector<2x8x128xf32> to vector<2x5x128xf32>
    %c112_i32_4 = arith.constant 112 : i32
    %15 = tpu.dynamic_rotate %13 by %c112_i32_4 dim 2 : vector<2x8x128xf32>, i32 -> vector<2x8x128xf32>
    %16 = vector.extract_strided_slice %15 {offsets = [0, 1, 0], sizes = [2, 5, 128], strides = [1, 1, 1]} : vector<2x8x128xf32> to vector<2x5x128xf32>
    %17 = arith.addf %14, %16 : vector<2x5x128xf32>
    %c96_i32_5 = arith.constant 96 : i32
    %18 = tpu.dynamic_rotate %13 by %c96_i32_5 dim 2 : vector<2x8x128xf32>, i32 -> vector<2x8x128xf32>
    %19 = vector.extract_strided_slice %18 {offsets = [0, 2, 0], sizes = [2, 5, 128], strides = [1, 1, 1]} : vector<2x8x128xf32> to vector<2x5x128xf32>
    %20 = arith.addf %17, %19 : vector<2x5x128xf32>
    %c80_i32 = arith.constant 80 : i32
    %21 = tpu.dynamic_rotate %13 by %c80_i32 dim 2 : vector<2x8x128xf32>, i32 -> vector<2x8x128xf32>
    %22 = vector.extract_strided_slice %21 {offsets = [0, 3, 0], sizes = [2, 5, 128], strides = [1, 1, 1]} : vector<2x8x128xf32> to vector<2x5x128xf32>
    %23 = arith.addf %20, %22 : vector<2x5x128xf32>
    %cst_6 = arith.constant dense<0xFF800000> : vector<2x128xf32>
    %24 = vector.multi_reduction <maximumf>, %23, %cst_6 [1] : vector<2x5x128xf32> to vector<2x128xf32>
    %25 = vector.extract_strided_slice %3 {offsets = [0, 0, 256], sizes = [2, 8, 128], strides = [1, 1, 1]} : vector<2x8x384xf32> to vector<2x8x128xf32>
    %26 = vector.extract_strided_slice %25 {offsets = [0, 0, 0], sizes = [2, 4, 128], strides = [1, 1, 1]} : vector<2x8x128xf32> to vector<2x4x128xf32>
    %c112_i32_7 = arith.constant 112 : i32
    %27 = tpu.dynamic_rotate %25 by %c112_i32_7 dim 2 : vector<2x8x128xf32>, i32 -> vector<2x8x128xf32>
    %28 = vector.extract_strided_slice %27 {offsets = [0, 1, 0], sizes = [2, 4, 128], strides = [1, 1, 1]} : vector<2x8x128xf32> to vector<2x4x128xf32>
    %29 = arith.addf %26, %28 : vector<2x4x128xf32>
    %c96_i32_8 = arith.constant 96 : i32
    %30 = tpu.dynamic_rotate %25 by %c96_i32_8 dim 2 : vector<2x8x128xf32>, i32 -> vector<2x8x128xf32>
    %31 = vector.extract_strided_slice %30 {offsets = [0, 2, 0], sizes = [2, 4, 128], strides = [1, 1, 1]} : vector<2x8x128xf32> to vector<2x4x128xf32>
    %32 = arith.addf %29, %31 : vector<2x4x128xf32>
    %c80_i32_9 = arith.constant 80 : i32
    %33 = tpu.dynamic_rotate %25 by %c80_i32_9 dim 2 : vector<2x8x128xf32>, i32 -> vector<2x8x128xf32>
    %34 = vector.extract_strided_slice %33 {offsets = [0, 3, 0], sizes = [2, 4, 128], strides = [1, 1, 1]} : vector<2x8x128xf32> to vector<2x4x128xf32>
    %35 = arith.addf %32, %34 : vector<2x4x128xf32>
    %c64_i32 = arith.constant 64 : i32
    %36 = tpu.dynamic_rotate %25 by %c64_i32 dim 2 : vector<2x8x128xf32>, i32 -> vector<2x8x128xf32>
    %37 = vector.extract_strided_slice %36 {offsets = [0, 4, 0], sizes = [2, 4, 128], strides = [1, 1, 1]} : vector<2x8x128xf32> to vector<2x4x128xf32>
    %38 = arith.addf %35, %37 : vector<2x4x128xf32>
    %cst_10 = arith.constant dense<0xFF800000> : vector<2x128xf32>
    %39 = vector.multi_reduction <maximumf>, %38, %cst_10 [1] : vector<2x4x128xf32> to vector<2x128xf32>
    %40 = tpu.concatenate %12, %24, %39 in 1 : vector<2x128xf32>, vector<2x128xf32>, vector<2x128xf32> -> vector<2x384xf32>
    %c0_11 = arith.constant 0 : index
    %c0_12 = arith.constant 0 : index
    %41 = vector.load %arg3[%c0_11, %c0_12] : memref<1x384xf32, #tpu.memory_space<vmem>>, vector<1x384xf32>
    %42 = vector.broadcast %41 : vector<1x384xf32> to vector<2x384xf32>
    %43 = arith.addf %40, %42 : vector<2x384xf32>
    %cst_13 = arith.constant 0.000000e+00 : f32
    %44 = vector.broadcast %cst_13 : f32 to vector<2x384xf32>
    %45 = arith.maximumf %43, %44 : vector<2x384xf32>
    %c0_14 = arith.constant 0 : index
    %c0_15 = arith.constant 0 : index
    %46 = vector.load %arg4[%c0_14, %c0_15] : memref<384x2xf32, #tpu.memory_space<vmem>>, vector<384x2xf32>
    %cst_16 = arith.constant dense<0.000000e+00> : vector<2x2xf32>
    %47 = tpu.matmul %45, %46, %cst_16 {dimension_numbers = #tpu.dot_dimension_numbers<[1], [0], [0], [1], [0, 0, 1, 1], [], []>} : vector<2x384xf32>, vector<384x2xf32>, vector<2x2xf32> -> vector<2x2xf32>
    %c0_17 = arith.constant 0 : index
    %c0_18 = arith.constant 0 : index
    %48 = vector.load %arg5[%c0_17, %c0_18] : memref<1x2xf32, #tpu.memory_space<vmem>>, vector<1x2xf32>
    %49 = vector.broadcast %48 : vector<1x2xf32> to vector<2x2xf32>
    %50 = arith.addf %47, %49 : vector<2x2xf32>
    %c0_19 = arith.constant 0 : index
    %c0_20 = arith.constant 0 : index
    %c0_21 = arith.constant 0 : index
    %51 = vector.load %arg6[%c0_19, %c0_20, %c0_21] : memref<1x2x2xf32, #tpu.memory_space<vmem>>, vector<1x2x2xf32>
    %52 = vector.shape_cast %51 : vector<1x2x2xf32> to vector<2x2xf32>
    %53 = vector.shape_cast %50 : vector<2x2xf32> to vector<1x2x2xf32>
    tpu.vector_store %arg6[%c0_19, %c0_20, %c0_21], %53 {strides = array<i32>} : memref<1x2x2xf32, #tpu.memory_space<vmem>>, vector<1x2x2xf32>,
    return
  }
  func.func @transform_0(%arg0: i32) -> (i32, i32) {
    %c0_i32 = arith.constant 0 : i32
    %c0_i32_0 = arith.constant 0 : i32
    return %arg0, %c0_i32 : i32, i32
  }
  func.func @transform_1(%arg0: i32) -> (i32, i32) {
    %c0_i32 = arith.constant 0 : i32
    %c0_i32_0 = arith.constant 0 : i32
    %c0_i32_1 = arith.constant 0 : i32
    return %c0_i32, %c0_i32_0 : i32, i32
  }
  func.func @transform_2(%arg0: i32) -> (i32, i32) {
    %c0_i32 = arith.constant 0 : i32
    %c0_i32_0 = arith.constant 0 : i32
    %c0_i32_1 = arith.constant 0 : i32
    return %c0_i32, %c0_i32_0 : i32, i32
  }
  func.func @transform_3(%arg0: i32) -> (i32, i32) {
    %c0_i32 = arith.constant 0 : i32
    %c0_i32_0 = arith.constant 0 : i32
    %c0_i32_1 = arith.constant 0 : i32
    return %c0_i32, %c0_i32_0 : i32, i32
  }
  func.func @transform_4(%arg0: i32) -> (i32, i32) {
    %c0_i32 = arith.constant 0 : i32
    %c0_i32_0 = arith.constant 0 : i32
    %c0_i32_1 = arith.constant 0 : i32
    return %c0_i32, %c0_i32_0 : i32, i32
  }
  func.func @transform_5(%arg0: i32) -> (i32, i32, i32) {
    %c0_i32 = arith.constant 0 : i32
    %c0_i32_0 = arith.constant 0 : i32
    %c0_i32_1 = arith.constant 0 : i32
    return %arg0, %c0_i32, %c0_i32_0 : i32, i32, i32
  }
}

</mosaic_0001>

<llo_original>
// kernel: tpu_custom_call.1
$region0: #{tpu_custom_call.1}
  #allocation0 [shape = 'u32[]', space=smem, size = 0x4, offset = 0x4, fixed_abs, tag = 'smem constant byte address 0x4 - core index']
  #allocation1 [shape = 'u32[72,128]{1,0:T(1,128)}', space=vmem, size = 0x9000, scoped, tag = 'internal scratch']
  %s0 = inlined_call_operand.vmem [shape: bf16[32,32], index: 0, kind: input, shape index: {}]
  %s1 = inlined_call_operand.vmem [shape: bf16[32,384], index: 1, kind: input, shape index: {}]
  %s2 = inlined_call_operand.vmem [shape: f32[1,384], index: 2, kind: input, shape index: {}]
  %s3 = inlined_call_operand.vmem [shape: f32[384,2], index: 3, kind: input, shape index: {}]
  %s4 = inlined_call_operand.vmem [shape: f32[1,2], index: 4, kind: input, shape index: {}]
  %s5 = inlined_call_operand.hbm [shape: f32[2,2,2], index: 5, kind: output, shape index: {}]
  %s6 = sld [smem:[#allocation0]]
  $region53: #{tpu_custom_call.1} parent=0
    _
  %s8 = ssub.s32 1, %s6
  %s9 = scalar_select 0, %s8, %s6
  $region1: #{tpu_custom_call.1} parent=0
    #allocation2 [shape = 'u8[2048]{0}', space=vmem, size = 0x800, scoped, tag = 'output window, operand 0']
    #allocation3 [shape = 's32[2]{0}', space=sflag, size = 0x8, scoped, tag = 'scoped memory for tpu_custom_call.1']
    %10 = vsyncpa [#allocation3], 0
    %s11 = scalar_lea.sflag [#allocation3], 1
    %12 = vsyncpa %s11, 0
    loop: start=0, step=1, limit=4
    $region2: #{tpu_custom_call.1} parent=1 // loop_pre_header
      _
    $region3: #{tpu_custom_call.1} parent=1 // loop_header
      %s14 = sphi 0, %s18
      %p15 = scmp.ge.s32.totalorder %s14, 4
      %s24 = sphi 0, %s26
      %s27 = sphi 0, %s24
      %s28 = sphi 0, %s27
      %s44 = sphi 0, %s28
      %s48 = sphi 0, %s48
      %s50 = sphi 0, %s48
      %s51 = sphi 0, %s50
      %s65 = sphi 0, %s51
      %s69 = sphi 0, %s69
      %s71 = sphi 0, %s69
      %s72 = sphi 0, %s71
      %s86 = sphi 0, %s72
      %s90 = sphi 0, %s90
      %s92 = sphi 0, %s90
      %s93 = sphi 0, %s92
      %s107 = sphi 0, %s93
      %s111 = sphi 0, %s111
      %s113 = sphi 0, %s111
      %s114 = sphi 0, %s113
      %s128 = sphi 0, %s114
      %s134 = sphi 0, %s136
      %s137 = sphi 0, %s134
      %s138 = sphi 0, %s137
      %s154 = sphi 0, %s138
    $region4: #{tpu_custom_call.1} parent=1 // loop_header_branch
      %17 = sbr.rel (%p15) target = $region8
    $region5: #{tpu_custom_call.1} parent=1 // loop_body
      %s19 = ssub.s32 %s14, 1
      %s20 = ssub.s32 %s14, 2
      %s21 = sadd.s32 %s14, 1
      %s22 = ssub.s32 %s14, %s21
      %p23 = scmp.eq.s32.totalorder %s22, 0
      %s25 = sadd.s32 %s24, 1
      %s26 = scalar_select %p23, %s24, %s25
      %p29 = pneg %p23
      %p30 = scmp.eq.s32.totalorder %s14, 1
      %p31 = por %p29, %p30
      %p32 = scmp.ne.s32.totalorder %s24, %s27
      %p33 = scmp.eq.s32.totalorder %s14, 0
      %p34 = por %p32, %p33
      %p35 = scmp.ne.s32.totalorder %s24, %s27
      %p36 = scmp.eq.s32.totalorder %s19, 1
      %p37 = por %p35, %p36
      %p38 = scmp.ne.s32.totalorder %s27, %s28
      %p39 = scmp.eq.s32.totalorder %s19, 0
      %p40 = por %p38, %p39
      %p41 = scmp.ne.s32.totalorder %s27, %s28
      %p42 = scmp.eq.s32.totalorder %s20, 1
      %p43 = por %p41, %p42
      %p45 = scmp.ne.s32.totalorder %s28, %s44
      %p46 = scmp.eq.s32.totalorder %s20, 0
      %p47 = por %p45, %p46
      %s49 = sadd.s32 %s48, 1
      %p52 = scmp.eq.s32.totalorder %s14, 1
      %p53 = scmp.ne.s32.totalorder %s48, %s50
      %p54 = scmp.eq.s32.totalorder %s14, 0
      %p55 = por %p53, %p54
      %p56 = scmp.ne.s32.totalorder %s48, %s50
      %p57 = scmp.eq.s32.totalorder %s19, 1
      %p58 = por %p56, %p57
      %p59 = scmp.ne.s32.totalorder %s50, %s51
      %p60 = scmp.eq.s32.totalorder %s19, 0
      %p61 = por %p59, %p60
      %p62 = scmp.ne.s32.totalorder %s50, %s51
      %p63 = scmp.eq.s32.totalorder %s20, 1
      %p64 = por %p62, %p63
      %p66 = scmp.ne.s32.totalorder %s51, %s65
      %p67 = scmp.eq.s32.totalorder %s20, 0
      %p68 = por %p66, %p67
      %s70 = sadd.s32 %s69, 1
      %p73 = scmp.eq.s32.totalorder %s14, 1
      %p74 = scmp.ne.s32.totalorder %s69, %s71
      %p75 = scmp.eq.s32.totalorder %s14, 0
      %p76 = por %p74, %p75
      %p77 = scmp.ne.s32.totalorder %s69, %s71
      %p78 = scmp.eq.s32.totalorder %s19, 1
      %p79 = por %p77, %p78
      %p80 = scmp.ne.s32.totalorder %s71, %s72
      %p81 = scmp.eq.s32.totalorder %s19, 0
      %p82 = por %p80, %p81
      %p83 = scmp.ne.s32.totalorder %s71, %s72
      %p84 = scmp.eq.s32.totalorder %s20, 1
      %p85 = por %p83, %p84
      %p87 = scmp.ne.s32.totalorder %s72, %s86
      %p88 = scmp.eq.s32.totalorder %s20, 0
      %p89 = por %p87, %p88
      %s91 = sadd.s32 %s90, 1
      %p94 = scmp.eq.s32.totalorder %s14, 1
      %p95 = scmp.ne.s32.totalorder %s90, %s92
      %p96 = scmp.eq.s32.totalorder %s14, 0
      %p97 = por %p95, %p96
      %p98 = scmp.ne.s32.totalorder %s90, %s92
      %p99 = scmp.eq.s32.totalorder %s19, 1
      %p100 = por %p98, %p99
      %p101 = scmp.ne.s32.totalorder %s92, %s93
      %p102 = scmp.eq.s32.totalorder %s19, 0
      %p103 = por %p101, %p102
      %p104 = scmp.ne.s32.totalorder %s92, %s93
      %p105 = scmp.eq.s32.totalorder %s20, 1
      %p106 = por %p104, %p105
      %p108 = scmp.ne.s32.totalorder %s93, %s107
      %p109 = scmp.eq.s32.totalorder %s20, 0
      %p110 = por %p108, %p109
      %s112 = sadd.s32 %s111, 1
      %p115 = scmp.eq.s32.totalorder %s14, 1
      %p116 = scmp.ne.s32.totalorder %s111, %s113
      %p117 = scmp.eq.s32.totalorder %s14, 0
      %p118 = por %p116, %p117
      %p119 = scmp.ne.s32.totalorder %s111, %s113
      %p120 = scmp.eq.s32.totalorder %s19, 1
      %p121 = por %p119, %p120
      %p122 = scmp.ne.s32.totalorder %s113, %s114
      %p123 = scmp.eq.s32.totalorder %s19, 0
      %p124 = por %p122, %p123
      %p125 = scmp.ne.s32.totalorder %s113, %s114
      %p126 = scmp.eq.s32.totalorder %s20, 1
      %p127 = por %p125, %p126
      %p129 = scmp.ne.s32.totalorder %s114, %s128
      %p130 = scmp.eq.s32.totalorder %s20, 0
      %p131 = por %p129, %p130
      %s132 = ssub.s32 %s14, %s21
      %p133 = scmp.eq.s32.totalorder %s132, 0
      %s135 = sadd.s32 %s134, 1
      %s136 = scalar_select %p133, %s134, %s135
      %p139 = pneg %p133
      %p140 = scmp.eq.s32.totalorder %s14, 1
      %p141 = por %p139, %p140
      %p142 = scmp.ne.s32.totalorder %s134, %s137
      %p143 = scmp.eq.s32.totalorder %s14, 0
      %p144 = por %p142, %p143
      %p145 = scmp.ne.s32.totalorder %s134, %s137
      %p146 = scmp.eq.s32.totalorder %s19, 1
      %p147 = por %p145, %p146
      %p148 = scmp.ne.s32.totalorder %s137, %s138
      %p149 = scmp.eq.s32.totalorder %s19, 0
      %p150 = por %p148, %p149
      %p151 = scmp.ne.s32.totalorder %s137, %s138
      %p152 = scmp.eq.s32.totalorder %s20, 1
      %p153 = por %p151, %p152
      %p155 = scmp.ne.s32.totalorder %s138, %s154
      %p156 = scmp.eq.s32.totalorder %s20, 0
      %p157 = por %p155, %p156
      %p158 = scmp.le.s32.totalorder 1, %s14
      %p159 = scmp.lt.s32.totalorder %s14, 3
      %p160 = pnand %p158, %p159
      %p161 = pneg %p160
      // Predicated region
      $region9: #{tpu_custom_call.1} parent=5 // pred_check
        _
      $region10: #{tpu_custom_call.1} parent=5 // pred_check_branch
        %163 = sbr.rel (%p160) target = $region12
      $region11: #{tpu_custom_call.1} parent=5 // pred_region
        %s164 = ssub.s32 %s14, 1
        // Predicated region
        $region13: #{tpu_custom_call.1} parent=11 // pred_check
          %p165 = pneg %p61
        $region14: #{tpu_custom_call.1} parent=11 // pred_check_branch
          %167 = sbr.rel (%p165) target = $region16
        $region15: #{tpu_custom_call.1} parent=11 // pred_region
          _
        $region16: #{tpu_custom_call.1} parent=11 // pred_fallthru
          _
        // Predicated region
        $region17: #{tpu_custom_call.1} parent=11 // pred_check
          %p168 = pneg %p82
        $region18: #{tpu_custom_call.1} parent=11 // pred_check_branch
          %170 = sbr.rel (%p168) target = $region20
        $region19: #{tpu_custom_call.1} parent=11 // pred_region
          _
        $region20: #{tpu_custom_call.1} parent=11 // pred_fallthru
          _
        // Predicated region
        $region21: #{tpu_custom_call.1} parent=11 // pred_check
          %p171 = pneg %p103
        $region22: #{tpu_custom_call.1} parent=11 // pred_check_branch
          %173 = sbr.rel (%p171) target = $region24
        $region23: #{tpu_custom_call.1} parent=11 // pred_region
          _
        $region24: #{tpu_custom_call.1} parent=11 // pred_fallthru
          _
        // Predicated region
        $region25: #{tpu_custom_call.1} parent=11 // pred_check
          %p174 = pneg %p124
        $region26: #{tpu_custom_call.1} parent=11 // pred_check_branch
          %176 = sbr.rel (%p174) target = $region28
        $region27: #{tpu_custom_call.1} parent=11 // pred_region
          _
        $region28: #{tpu_custom_call.1} parent=11 // pred_fallthru
          _
      $region12: #{tpu_custom_call.1} parent=5 // pred_fallthru
        _
      %p177 = scmp.lt.s32.totalorder %s14, 2
      // Predicated region
      $region29: #{tpu_custom_call.1} parent=5 // pred_check
        %p178 = pneg %p177
      $region30: #{tpu_custom_call.1} parent=5 // pred_check_branch
        %180 = sbr.rel (%p178) target = $region32
      $region31: #{tpu_custom_call.1} parent=5 // pred_region
        // Predicated region
        $region33: #{tpu_custom_call.1} parent=31 // pred_check
          %p181 = pneg %p34
        $region34: #{tpu_custom_call.1} parent=31 // pred_check_branch
          %183 = sbr.rel (%p181) target = $region36
        $region35: #{tpu_custom_call.1} parent=31 // pred_region
          %s184 = smul.u32 2, %s14
          %p185 = scmp.lt.s32.totalorder %s184, 3
          %s186 = scalar_select %p185, %s184, 3
          %s187 = smul.addr %s186, 4
          %s188 = scalar_lea.vmem %s0, %s187
          %s189 = smul.u32 2, %s14
        $region36: #{tpu_custom_call.1} parent=31 // pred_fallthru
          _
      $region32: #{tpu_custom_call.1} parent=5 // pred_fallthru
        _
      %p190 = scmp.le.s32.totalorder 1, %s14
      %p191 = scmp.lt.s32.totalorder %s14, 3
      %p192 = pnand %p190, %p191
      %p193 = pneg %p192
      // Predicated region
      $region37: #{tpu_custom_call.1} parent=5 // pred_check
        _
      $region38: #{tpu_custom_call.1} parent=5 // pred_check_branch
        %195 = sbr.rel (%p192) target = $region40
      $region39: #{tpu_custom_call.1} parent=5 // pred_region
        %s196 = ssub.s32 %s14, 1
        %s197 = smul.u32 2, %s19
        %p198 = scmp.lt.s32.totalorder %s197, 3
        %s199 = scalar_select %p198, %s197, 3
        %s200 = smul.addr %s199, 4
        %s201 = scalar_lea.vmem %s0, %s200
        %p202 = pneg %p40
        %p203 = pneg %p37
        %p204 = pneg %p61
        %p205 = pneg %p58
        %p206 = pneg %p82
        %p207 = pneg %p79
        %p208 = pneg %p103
        %p209 = pneg %p100
        %p210 = pneg %p124
        %p211 = pneg %p121
        %p212 = pneg %p150
        %p213 = pneg %p147
        %s214 = sand.u32 %s137, 1
        %s215 = scalar_lea.sflag [#allocation3], %s214
        %s216 = sand.u32 %s137, 1
        %s217 = smul.addr %s216, 2
        %s218 = scalar_lea.vmem [#allocation2], %s217
        %s219 = smul.u32 2, %s19
        %p220 = scmp.lt.s32.totalorder %s219, 3
        %s221 = scalar_select %p220, %s219, 3
        %s222 = smul.addr %s221, 4
        %s223 = scalar_lea.vmem %s0, %s222
        %s224 = smul.u32 2, %s19
        %v226 = vld [vmem:[%s223] sm:$0xf]
        %v227 = vld [vmem:[%s223 + $0x4] sm:$0xf]
        %v228 = vld [vmem:[%s1] sm:$0xff]
        %v229 = vld [vmem:[%s1 + $0x8] sm:$0xf]
        %v230 = vld [vmem:[%s1 + $0xc] sm:$0xff]
        %v231 = vld [vmem:[%s1 + $0x14] sm:$0xf]
        %v232 = vld [vmem:[%s1 + $0x18] sm:$0xff]
        %v233 = vld [vmem:[%s1 + $0x20] sm:$0xf]
        %v234 = vld [vmem:[%s1 + $0x24] sm:$0xff]
        %v235 = vld [vmem:[%s1 + $0x2c] sm:$0xf]
        %v238 = vunpack.c.l.b16 %v226
        %v239 = vunpack.c.l.b16 %v227
        %v240 = vpack.c.b16 %v239, %v238
        %v249 = vunpack.c.l.b16 %v228
        %v250 = vunpack.c.h.b16 %v228
        %v251 = vunpack.c.l.b16 %v229
        %v252 = vunpack.c.l.b16 %v230
        %v253 = vunpack.c.h.b16 %v230
        %v254 = vunpack.c.l.b16 %v231
        %v255 = vunpack.c.l.b16 %v232
        %v256 = vunpack.c.h.b16 %v232
        %v257 = vunpack.c.l.b16 %v233
        %v258 = vunpack.c.l.b16 %v234
        %v259 = vunpack.c.h.b16 %v234
        %v260 = vunpack.c.l.b16 %v235
        %v261 = vpack.c.b16 %v252, %v249
        %v262 = vpack.c.b16 %v253, %v250
        %v263 = vpack.c.b16 %v254, %v251
        %v264 = vpack.c.b16 %v258, %v255
        %v265 = vpack.c.b16 %v259, %v256
        %v266 = vpack.c.b16 %v260, %v257
        %vm273 = vcmask 261120
        %v275 = vsel %vm273, %v240, 0
        %277 = vmatpush.bf16.msra.mxu0 0
        %278 = vmatpush.bf16.msra.mxu0 0
        %279 = vmatpush.bf16.msra.mxu0 0
        %280 = vmatpush.bf16.msra.mxu0 0
        %281 = vmatpush.bf16.msra.mxu0 0
        %282 = vmatpush.bf16.msra.mxu0 0
        %283 = vmatpush.bf16.msra.mxu0 %v264
        %284 = vmatpush.bf16.msra.mxu0 %v261
        %285 = vmatmul.bf16.gmra.mxu0 %v275
        %v286 = vpop.f32.mrf.mxu0
        %v287 = vadd.f32 0.0, %v286
        %v288 = vpop.f32.mrf.mxu0
        %v289 = vadd.f32 0.0, %v288
        %290 = vdwg.mxu0
        %291 = vmatpush.bf16.msra.mxu0 0
        %292 = vmatpush.bf16.msra.mxu0 0
        %293 = vmatpush.bf16.msra.mxu0 0
        %294 = vmatpush.bf16.msra.mxu0 0
        %295 = vmatpush.bf16.msra.mxu0 0
        %296 = vmatpush.bf16.msra.mxu0 0
        %297 = vmatpush.bf16.msra.mxu0 %v265
        %298 = vmatpush.bf16.msra.mxu0 %v262
        %299 = vmatmul.bf16.gmra.mxu0 %v275
        %v300 = vpop.f32.mrf.mxu0
        %v301 = vadd.f32 0.0, %v300
        %v302 = vpop.f32.mrf.mxu0
        %v303 = vadd.f32 0.0, %v302
        %304 = vdwg.mxu0
        %305 = vmatpush.bf16.msra.mxu0 0
        %306 = vmatpush.bf16.msra.mxu0 0
        %307 = vmatpush.bf16.msra.mxu0 0
        %308 = vmatpush.bf16.msra.mxu0 0
        %309 = vmatpush.bf16.msra.mxu0 0
        %310 = vmatpush.bf16.msra.mxu0 0
        %311 = vmatpush.bf16.msra.mxu0 %v266
        %312 = vmatpush.bf16.msra.mxu0 %v263
        %313 = vmatmul.bf16.gmra.mxu0 %v275
        %v314 = vpop.f32.mrf.mxu0
        %v315 = vadd.f32 0.0, %v314
        %v316 = vpop.f32.mrf.mxu0
        %v317 = vadd.f32 0.0, %v316
        %318 = vdwg.mxu0
        %319 = vrot.lane.b32.xlu0 %v287, 112
        %v320 = vpop.permute.xlu0 %319
        %321 = vrot.lane.b32.xlu0 %v289, 112
        %v322 = vpop.permute.xlu0 %321
        %v325 = vrot.slane %v320, 1
        %v326 = vrot.slane %v322, 1
        %v329 = vadd.f32 %v287, %v325
        %v330 = vadd.f32 %v289, %v326
        %331 = vrot.lane.b32.xlu0 %v287, 96
        %v332 = vpop.permute.xlu0 %331
        %333 = vrot.lane.b32.xlu0 %v289, 96
        %v334 = vpop.permute.xlu0 %333
        %v337 = vrot.slane %v332, 2
        %v338 = vrot.slane %v334, 2
        %v341 = vadd.f32 %v329, %v337
        %v342 = vadd.f32 %v330, %v338
        %vm343 = vcmask 1045504
        %v344 = vsel %vm343, %v341, -inf
        %v345 = vrot.slane %v344, 4
        %v346 = vmax.f32 %v344, %v345
        %v347 = vrot.slane %v346, 2
        %v348 = vmax.f32 %v346, %v347
        %v349 = vrot.slane %v348, 1
        %v350 = vmax.f32 %v348, %v349
        %v351 = vsel %vm343, %v342, -inf
        %v352 = vrot.slane %v351, 4
        %v353 = vmax.f32 %v351, %v352
        %v354 = vrot.slane %v353, 2
        %v355 = vmax.f32 %v353, %v354
        %v356 = vrot.slane %v355, 1
        %v357 = vmax.f32 %v355, %v356
        %358 = vrot.lane.b32.xlu0 %v301, 112
        %v359 = vpop.permute.xlu0 %358
        %360 = vrot.lane.b32.xlu0 %v303, 112
        %v361 = vpop.permute.xlu0 %360
        %v364 = vrot.slane %v359, 1
        %v365 = vrot.slane %v361, 1
        %v368 = vadd.f32 %v301, %v364
        %v369 = vadd.f32 %v303, %v365
        %370 = vrot.lane.b32.xlu0 %v301, 96
        %v371 = vpop.permute.xlu0 %370
        %372 = vrot.lane.b32.xlu0 %v303, 96
        %v373 = vpop.permute.xlu0 %372
        %v376 = vrot.slane %v371, 2
        %v377 = vrot.slane %v373, 2
        %v380 = vadd.f32 %v368, %v376
        %v381 = vadd.f32 %v369, %v377
        %382 = vrot.lane.b32.xlu0 %v301, 80
        %v383 = vpop.permute.xlu0 %382
        %384 = vrot.lane.b32.xlu0 %v303, 80
        %v385 = vpop.permute.xlu0 %384
        %v388 = vrot.slane %v383, 3
        %v389 = vrot.slane %v385, 3
        %v392 = vadd.f32 %v380, %v388
        %v393 = vadd.f32 %v381, %v389
        %vm394 = vcmask 1044480
        %v395 = vsel %vm394, %v392, -inf
        %v396 = vrot.slane %v395, 4
        %v397 = vmax.f32 %v395, %v396
        %v398 = vrot.slane %v397, 2
        %v399 = vmax.f32 %v397, %v398
        %v400 = vrot.slane %v399, 1
        %v401 = vmax.f32 %v399, %v400
        %v402 = vsel %vm394, %v393, -inf
        %v403 = vrot.slane %v402, 4
        %v404 = vmax.f32 %v402, %v403
        %v405 = vrot.slane %v404, 2
        %v406 = vmax.f32 %v404, %v405
        %v407 = vrot.slane %v406, 1
        %v408 = vmax.f32 %v406, %v407
        %409 = vrot.lane.b32.xlu0 %v315, 112
        %v410 = vpop.permute.xlu0 %409
        %411 = vrot.lane.b32.xlu0 %v317, 112
        %v412 = vpop.permute.xlu0 %411
        %v415 = vrot.slane %v410, 1
        %v416 = vrot.slane %v412, 1
        %v419 = vadd.f32 %v315, %v415
        %v420 = vadd.f32 %v317, %v416
        %421 = vrot.lane.b32.xlu0 %v315, 96
        %v422 = vpop.permute.xlu0 %421
        %423 = vrot.lane.b32.xlu0 %v317, 96
        %v424 = vpop.permute.xlu0 %423
        %v427 = vrot.slane %v422, 2
        %v428 = vrot.slane %v424, 2
        %v431 = vadd.f32 %v419, %v427
        %v432 = vadd.f32 %v420, %v428
        %433 = vrot.lane.b32.xlu0 %v315, 80
        %v434 = vpop.permute.xlu0 %433
        %435 = vrot.lane.b32.xlu0 %v317, 80
        %v436 = vpop.permute.xlu0 %435
        %v439 = vrot.slane %v434, 3
        %v440 = vrot.slane %v436, 3
        %v443 = vadd.f32 %v431, %v439
        %v444 = vadd.f32 %v432, %v440
        %445 = vrot.lane.b32.xlu0 %v315, 64
        %v446 = vpop.permute.xlu0 %445
        %447 = vrot.lane.b32.xlu0 %v317, 64
        %v448 = vpop.permute.xlu0 %447
        %v451 = vrot.slane %v446, 4
        %v452 = vrot.slane %v448, 4
        %v455 = vadd.f32 %v443, %v451
        %v456 = vadd.f32 %v444, %v452
        %vm457 = vcmask 1043456
        %v458 = vsel %vm457, %v455, -inf
        %v459 = vrot.slane %v458, 4
        %v460 = vmax.f32 %v458, %v459
        %v461 = vrot.slane %v460, 2
        %v462 = vmax.f32 %v460, %v461
        %v463 = vrot.slane %v462, 1
        %v464 = vmax.f32 %v462, %v463
        %v465 = vsel %vm457, %v456, -inf
        %v466 = vrot.slane %v465, 4
        %v467 = vmax.f32 %v465, %v466
        %v468 = vrot.slane %v467, 2
        %v469 = vmax.f32 %v467, %v468
        %v470 = vrot.slane %v469, 1
        %v471 = vmax.f32 %v469, %v470
        %vm474 = vcmask 1041409
        %v475 = vsel %vm474, %v357, %v350
        %v479 = vsel %vm474, %v408, %v401
        %v483 = vsel %vm474, %v471, %v464
        %v485 = vld [vmem:[%s2] sm:$0x7]
        %v487 = vperm.slane %v485, 0
        %v488 = vperm.slane %v485, 1
        %v489 = vperm.slane %v485, 2
        %v493 = vadd.f32 %v475, %v487
        %v494 = vadd.f32 %v479, %v488
        %v495 = vadd.f32 %v483, %v489
        %v496 = vmax.f32 %v493, 0.0
        %v497 = vmax.f32 %v494, 0.0
        %v498 = vmax.f32 %v495, 0.0
        %v499 = vld [vmem:[%s3] sm:$0xff]
        %v500 = vld [vmem:[%s3 + $0x8] sm:$0xff]
        %v501 = vld [vmem:[%s3 + $0x10] sm:$0xff]
        %v502 = vld [vmem:[%s3 + $0x18] sm:$0xff]
        %v503 = vld [vmem:[%s3 + $0x20] sm:$0xff]
        %v504 = vld [vmem:[%s3 + $0x28] sm:$0xff]
        %v505 = vld [vmem:[%s3 + $0x30] sm:$0xff]
        %v506 = vld [vmem:[%s3 + $0x38] sm:$0xff]
        %v507 = vld [vmem:[%s3 + $0x40] sm:$0xff]
        %v508 = vld [vmem:[%s3 + $0x48] sm:$0xff]
        %v509 = vld [vmem:[%s3 + $0x50] sm:$0xff]
        %v510 = vld [vmem:[%s3 + $0x58] sm:$0xff]
        %v511 = vld [vmem:[%s3 + $0x60] sm:$0xff]
        %v512 = vld [vmem:[%s3 + $0x68] sm:$0xff]
        %v513 = vld [vmem:[%s3 + $0x70] sm:$0xff]
        %v514 = vld [vmem:[%s3 + $0x78] sm:$0xff]
        %v515 = vld [vmem:[%s3 + $0x80] sm:$0xff]
        %v516 = vld [vmem:[%s3 + $0x88] sm:$0xff]
        %v517 = vld [vmem:[%s3 + $0x90] sm:$0xff]
        %v518 = vld [vmem:[%s3 + $0x98] sm:$0xff]
        %v519 = vld [vmem:[%s3 + $0xa0] sm:$0xff]
        %v520 = vld [vmem:[%s3 + $0xa8] sm:$0xff]
        %v521 = vld [vmem:[%s3 + $0xb0] sm:$0xff]
        %v522 = vld [vmem:[%s3 + $0xb8] sm:$0xff]
        %v523 = vld [vmem:[%s3 + $0xc0] sm:$0xff]
        %v524 = vld [vmem:[%s3 + $0xc8] sm:$0xff]
        %v525 = vld [vmem:[%s3 + $0xd0] sm:$0xff]
        %v526 = vld [vmem:[%s3 + $0xd8] sm:$0xff]
        %v527 = vld [vmem:[%s3 + $0xe0] sm:$0xff]
        %v528 = vld [vmem:[%s3 + $0xe8] sm:$0xff]
        %v529 = vld [vmem:[%s3 + $0xf0] sm:$0xff]
        %v530 = vld [vmem:[%s3 + $0xf8] sm:$0xff]
        %v531 = vld [vmem:[%s3 + $0x100] sm:$0xff]
        %v532 = vld [vmem:[%s3 + $0x108] sm:$0xff]
        %v533 = vld [vmem:[%s3 + $0x110] sm:$0xff]
        %v534 = vld [vmem:[%s3 + $0x118] sm:$0xff]
        %v535 = vld [vmem:[%s3 + $0x120] sm:$0xff]
        %v536 = vld [vmem:[%s3 + $0x128] sm:$0xff]
        %v537 = vld [vmem:[%s3 + $0x130] sm:$0xff]
        %v538 = vld [vmem:[%s3 + $0x138] sm:$0xff]
        %v539 = vld [vmem:[%s3 + $0x140] sm:$0xff]
        %v540 = vld [vmem:[%s3 + $0x148] sm:$0xff]
        %v541 = vld [vmem:[%s3 + $0x150] sm:$0xff]
        %v542 = vld [vmem:[%s3 + $0x158] sm:$0xff]
        %v543 = vld [vmem:[%s3 + $0x160] sm:$0xff]
        %v544 = vld [vmem:[%s3 + $0x168] sm:$0xff]
        %v545 = vld [vmem:[%s3 + $0x170] sm:$0xff]
        %v546 = vld [vmem:[%s3 + $0x178] sm:$0xff]
        %v547 = vld [vmem:[%s4] sm:$0x1]
        %v549 = vperm.slane %v547, 0
        %551 = vmatpush.msra.mxu0 %v514
        %552 = vmatpush.msra.mxu0 %v513
        %553 = vmatpush.msra.mxu0 %v512
        %554 = vmatpush.msra.mxu0 %v511
        %555 = vmatpush.msra.mxu0 %v510
        %556 = vmatpush.msra.mxu0 %v509
        %557 = vmatpush.msra.mxu0 %v508
        %558 = vmatpush.msra.mxu0 %v507
        %559 = vmatpush.msra.mxu0 %v506
        %560 = vmatpush.msra.mxu0 %v505
        %561 = vmatpush.msra.mxu0 %v504
        %562 = vmatpush.msra.mxu0 %v503
        %563 = vmatpush.msra.mxu0 %v502
        %564 = vmatpush.msra.mxu0 %v501
        %565 = vmatpush.msra.mxu0 %v500
        %566 = vmatpush.msra.mxu0 %v499
        %567 = vmatmul.f32.gmra.mxu0 %v496
        %v568 = vpop.f32.mrf.mxu0
        %v569 = vadd.f32 %v549, %v568
        %570 = vdwg.mxu0
        %571 = vmatpush.msra.mxu0 %v530
        %572 = vmatpush.msra.mxu0 %v529
        %573 = vmatpush.msra.mxu0 %v528
        %574 = vmatpush.msra.mxu0 %v527
        %575 = vmatpush.msra.mxu0 %v526
        %576 = vmatpush.msra.mxu0 %v525
        %577 = vmatpush.msra.mxu0 %v524
        %578 = vmatpush.msra.mxu0 %v523
        %579 = vmatpush.msra.mxu0 %v522
        %580 = vmatpush.msra.mxu0 %v521
        %581 = vmatpush.msra.mxu0 %v520
        %582 = vmatpush.msra.mxu0 %v519
        %583 = vmatpush.msra.mxu0 %v518
        %584 = vmatpush.msra.mxu0 %v517
        %585 = vmatpush.msra.mxu0 %v516
        %586 = vmatpush.msra.mxu0 %v515
        %587 = vmatmul.f32.gmra.mxu0 %v497
        %v588 = vpop.f32.mrf.mxu0
        %v589 = vadd.f32 %v569, %v588
        %590 = vdwg.mxu0
        %591 = vmatpush.msra.mxu0 %v546
        %592 = vmatpush.msra.mxu0 %v545
        %593 = vmatpush.msra.mxu0 %v544
        %594 = vmatpush.msra.mxu0 %v543
        %595 = vmatpush.msra.mxu0 %v542
        %596 = vmatpush.msra.mxu0 %v541
        %597 = vmatpush.msra.mxu0 %v540
        %598 = vmatpush.msra.mxu0 %v539
        %599 = vmatpush.msra.mxu0 %v538
        %600 = vmatpush.msra.mxu0 %v537
        %601 = vmatpush.msra.mxu0 %v536
        %602 = vmatpush.msra.mxu0 %v535
        %603 = vmatpush.msra.mxu0 %v534
        %604 = vmatpush.msra.mxu0 %v533
        %605 = vmatpush.msra.mxu0 %v532
        %606 = vmatpush.msra.mxu0 %v531
        %607 = vmatmul.f32.gmra.mxu0 %v498
        %v608 = vpop.f32.mrf.mxu0
        %v609 = vadd.f32 %v589, %v608
        %610 = vdwg.mxu0
        %vm611 = vcmask 9216
        %612 = vst.msk [vmem:[%s218] sm:$0x3] %vm611, %v609
        %s613 = sand.u32 %s137, 1
        %s614 = scalar_lea.sflag [#allocation3], %s613
        %s615 = sand.u32 %s137, 1
        %s616 = smul.addr %s615, 2
        %s617 = scalar_lea.vmem [#allocation2], %s616
        // Predicated region
        $region41: #{tpu_custom_call.1} parent=39 // pred_check
          %p618 = pneg %p147
        $region42: #{tpu_custom_call.1} parent=39 // pred_check_branch
          %620 = sbr.rel (%p618) target = $region44
        $region43: #{tpu_custom_call.1} parent=39 // pred_region
          %622 = vsyncadd %s614, 0
          %s623 = smul.addr %s19, 2
          %s624 = scalar_lea.hbm %s5, %s623
          %s626 = sshll.u32 %s617, 4
          %s627 = int_to_ptr.vmem [resolvable:$true] %s626
          %s628 = sshll.u32 %s624, 4
          %s629 = int_to_ptr.hbm [resolvable:$true] %s628
          %631 = dma.vmem_to_hbm [thread:$0]  %s627, 32, %s629, %s614
        $region44: #{tpu_custom_call.1} parent=39 // pred_fallthru
          _
      $region40: #{tpu_custom_call.1} parent=5 // pred_fallthru
        _
      %p632 = scmp.le.s32.totalorder 2, %s14
      // Predicated region
      $region45: #{tpu_custom_call.1} parent=5 // pred_check
        %p633 = pneg %p632
      $region46: #{tpu_custom_call.1} parent=5 // pred_check_branch
        %635 = sbr.rel (%p633) target = $region48
      $region47: #{tpu_custom_call.1} parent=5 // pred_region
        %s636 = ssub.s32 %s14, 2
        // Predicated region
        $region49: #{tpu_custom_call.1} parent=47 // pred_check
          %p637 = pneg %p153
        $region50: #{tpu_custom_call.1} parent=47 // pred_check_branch
          %639 = sbr.rel (%p637) target = $region52
        $region51: #{tpu_custom_call.1} parent=47 // pred_region
          %s640 = sand.u32 %s138, 1
          %s641 = scalar_lea.sflag [#allocation3], %s640
          %s642 = sand.u32 %s138, 1
          %s643 = smul.addr %s642, 2
          %s644 = scalar_lea.vmem [#allocation2], %s643
          %646 = dma.done %s641, 32
        $region52: #{tpu_custom_call.1} parent=47 // pred_fallthru
          _
      $region48: #{tpu_custom_call.1} parent=5 // pred_fallthru
        _
    $region6: #{tpu_custom_call.1} parent=1 // loop_footer
      %s18 = sadd.s32 1, %s14
    $region7: #{tpu_custom_call.1} parent=1 // loop_footer_branch
      %13 = sbr.rel target = $region3
    $region8: #{tpu_custom_call.1} parent=1 // loop_exit
      _
    %647 = vsyncpa [#allocation3], 1
    %s648 = scalar_lea.sflag [#allocation3], 1
    %649 = vsyncpa %s648, 1

</llo_original>
